<compile_context>
chip_gen: v6e
topology: v6e:2x2x1
jax: 0.10.0
libtpu: 0.0.40
codegen_flags: <defaults>
</compile_context>

<pallas_src>
import jax
import jax.numpy as jnp
from jax.experimental import pallas as pl
from jax.experimental.pallas import tpu as pltpu

EPS = 1e-5


def _gelu_exact(x):
    # PyTorch nn.GELU() default = exact erf formulation.
    return 0.5 * x * (1.0 + jax.lax.erf(x * (1.0 / jnp.sqrt(2.0).astype(x.dtype))))


def _layer_norm(h, gamma, beta):
    mu = jnp.mean(h, axis=-1, keepdims=True)
    var = jnp.mean((h - mu) ** 2, axis=-1, keepdims=True)
    inv = jax.lax.rsqrt(var + EPS)
    return (h - mu) * inv * gamma + beta


def _msgt_kernel(
    x_ref,        # (TILE_N, E)  row tile of node embeddings
    w_attn_ref,   # (E, E)       fused attention weight (resident)
    w1_ref,       # (E, 4E)      FFN up projection      (resident)
    b1_ref,       # (1, 4E)      FFN up bias            (resident)
    w2_ref,       # (4E, E)      FFN down projection    (resident)
    vecs_ref,     # (8, E)       packed [b_attn, g1, be1, b2, g2, be2, 0, 0]
    out_ref,      # (TILE_N, E)
    ff_ref,       # VMEM scratch (TILE_N, 4E) f32
):
    x = x_ref[...]
    vecs = vecs_ref[...]
    b_attn = vecs[0:1, :]
    g1, be1 = vecs[1:2, :], vecs[2:3, :]
    b2 = vecs[3:4, :]
    g2, be2 = vecs[4:5, :], vecs[5:6, :]

    # fused attention branch: alpha*local + beta*global collapsed to one matmul
    attn_out = jnp.dot(x, w_attn_ref[...], preferred_element_type=jnp.float32) + b_attn

    # norm1(x + attn_out)
    h = _layer_norm(x + attn_out, g1, be1)

    # feed forward: Linear -> GELU -> (dropout=id) -> Linear -> (dropout=id)
    ff_ref[...] = _gelu_exact(
        jnp.dot(h, w1_ref[...], preferred_element_type=jnp.float32) + b1_ref[...])
    ff = jnp.dot(ff_ref[...], w2_ref[...], preferred_element_type=jnp.float32) + b2

    # norm2(h + ff)
    out_ref[...] = _layer_norm(h + ff, g2, be2)


def init_params(key, embedding_dim):
    """Deterministic synthetic parameters (shapes match the PyTorch module).
    Weight matrices are stored transposed as (in_dim, out_dim)."""
    E = embedding_dim
    keys = jax.random.split(key, 8)

    def w(k, shape, fan_in):
        return (jax.random.normal(k, shape, jnp.float32) / jnp.sqrt(fan_in)).astype(jnp.float32)

    params = {
        # local MultiheadAttention: V slice of in_proj + out_proj
        "wv_l": w(keys[0], (E, E), E), "bv_l": jnp.zeros((1, E), jnp.float32),
        "wo_l": w(keys[1], (E, E), E), "bo_l": jnp.zeros((1, E), jnp.float32),
        # global MultiheadAttention
        "wv_g": w(keys[2], (E, E), E), "bv_g": jnp.zeros((1, E), jnp.float32),
        "wo_g": w(keys[3], (E, E), E), "bo_g": jnp.zeros((1, E), jnp.float32),
        # LayerNorms (norm3 exists in the module but is never used in forward)
        "g1": jnp.ones((1, E), jnp.float32), "be1": jnp.zeros((1, E), jnp.float32),
        "g2": jnp.ones((1, E), jnp.float32), "be2": jnp.zeros((1, E), jnp.float32),
        # feed-forward
        "w1": w(keys[4], (E, 4 * E), E), "b1": jnp.zeros((1, 4 * E), jnp.float32),
        "w2": w(keys[5], (4 * E, E), 4 * E), "b2": jnp.zeros((1, E), jnp.float32),
        # alpha, beta (nn.Parameter, 0.5 each)
        "ab": jnp.array([0.5, 0.5], jnp.float32),
    }
    return params


def _round_up(v, m):
    return (v + m - 1) // m * m


@jax.jit
def multi_scale_graph_transformer_layer(x, params, edge_index=None, edge_weight=None):
    """Pallas forward.  edge_index / edge_weight are unused by the reference
    forward() and accepted only for signature parity."""
    N, E = x.shape
    H = 4 * E

    # ---- algebraic fusion of the two seq_len==1 attention branches (in XLA,
    # outside the kernel):  x@(a*Wv_l@Wo_l + b*Wv_g@Wo_g) + fused bias.
    alpha = params["ab"][0]
    beta = params["ab"][1]
    w_attn = (alpha * (params["wv_l"] @ params["wo_l"])
              + beta * (params["wv_g"] @ params["wo_g"]))
    b_attn = (alpha * (params["bv_l"] @ params["wo_l"] + params["bo_l"])
              + beta * (params["bv_g"] @ params["wo_g"] + params["bo_g"]))

    # ---- pack all (1, E) vectors into a single sublane-aligned (8, E) slab
    vecs = jnp.concatenate(
        [b_attn, params["g1"], params["be1"], params["b2"],
         params["g2"], params["be2"], jnp.zeros((2, E), jnp.float32)],
        axis=0)

    # ---- row tiling (second-to-last block dim must be a multiple of 8)
    TILE_N = min(256, _round_up(N, 8))
    n_pad = _round_up(N, TILE_N)
    x_p = x if n_pad == N else jnp.pad(x, ((0, n_pad - N), (0, 0)))

    resident = lambda i: (0, 0)

    out = pl.pallas_call(
        _msgt_kernel,
        out_shape=jax.ShapeDtypeStruct((n_pad, E), jnp.float32),
        grid_spec=pltpu.PrefetchScalarGridSpec(
            num_scalar_prefetch=0,
            grid=(n_pad // TILE_N,),
            in_specs=[
                pl.BlockSpec((TILE_N, E), lambda i: (i, 0)),  # x (row tile)
                pl.BlockSpec((E, E), resident),               # fused attn weight
                pl.BlockSpec((E, H), resident),               # w1
                pl.BlockSpec((1, H), resident),               # b1
                pl.BlockSpec((H, E), resident),               # w2
                pl.BlockSpec((8, E), resident),               # packed vectors
            ],
            out_specs=pl.BlockSpec((TILE_N, E), lambda i: (i, 0)),
            scratch_shapes=[pltpu.VMEM((TILE_N, H), jnp.float32)],
        ),
        compiler_params=pltpu.CompilerParams(
            dimension_semantics=("parallel",),
            vmem_limit_bytes=32 * 1024 * 1024,
        ),
    )(x_p, w_attn, params["w1"], params["b1"], params["w2"], vecs)

    out = out[:N]

    # Attention weights: softmax over a single key (seq_len==1) is exactly 1.0,
    # averaged over heads -> (N, 1, 1) of ones.  Trivial, kept in JAX.
    local_attn = jnp.ones((N, 1, 1), jnp.float32)
    global_attn = jnp.ones((N, 1, 1), jnp.float32)
    return out, (local_attn, global_attn)


if __name__ == "__main__":
    key = jax.random.PRNGKey(0)
    k_x, k_p, k_ew = jax.random.split(key, 3)

    num_nodes = 16
    embedding_dim = 32      # num_heads=4, global uses num_heads//2=2 (no effect here)

    x = jax.random.normal(k_x, (num_nodes, embedding_dim), jnp.float32)
    # edge_index / edge_weight are unused by forward(); constructed for parity.
    edge_index = jnp.stack(
        [jnp.arange(num_nodes, dtype=jnp.int32),
         (jnp.arange(num_nodes, dtype=jnp.int32) + 1) % num_nodes], axis=0)
    edge_weight = jax.random.uniform(k_ew, (num_nodes,), jnp.float32)

    params = init_params(k_p, embedding_dim)

    out, (local_attn, global_attn) = multi_scale_graph_transformer_layer(
        x, params, edge_index, edge_weight)
    jax.block_until_ready(out)
    jax.block_until_ready(local_attn)
    jax.block_until_ready(global_attn)

    assert out.shape == (num_nodes, embedding_dim)
    assert local_attn.shape == (num_nodes, 1, 1)
    assert global_attn.shape == (num_nodes, 1, 1)
    assert bool(jnp.all(jnp.isfinite(out)))
    print("KERNEL_OK")
</pallas_src>

<mosaic_0001>
module attributes {stable_mosaic.version = 11 : i64} {
  func.func @_msgt_kernel(%arg0: i32, %arg1: memref<16x32xf32, #tpu.memory_space<vmem>>, %arg2: memref<32x32xf32, #tpu.memory_space<vmem>>, %arg3: memref<32x128xf32, #tpu.memory_space<vmem>>, %arg4: memref<1x128xf32, #tpu.memory_space<vmem>>, %arg5: memref<128x32xf32, #tpu.memory_space<vmem>>, %arg6: memref<8x32xf32, #tpu.memory_space<vmem>>, %arg7: memref<16x32xf32, #tpu.memory_space<vmem>>, %arg8: memref<16x128xf32, #tpu.memory_space<vmem>>) attributes {dimension_semantics = [#tpu.dimension_semantics<parallel>], iteration_bounds = array<i64: 1>, scalar_prefetch = 0 : i64, scratch_operands = 1 : i64, tpu.core_type = #tpu.core_type<tc>, window_params = [{transform_indices = @transform_0, window_bounds = array<i64: 16, 32>}, {pipeline_mode = #tpu.pipeline_mode<synchronous>, transform_indices = @transform_1, window_bounds = array<i64: 32, 32>}, {pipeline_mode = #tpu.pipeline_mode<synchronous>, transform_indices = @transform_2, window_bounds = array<i64: 32, 128>}, {pipeline_mode = #tpu.pipeline_mode<synchronous>, transform_indices = @transform_3, window_bounds = array<i64: 1, 128>}, {pipeline_mode = #tpu.pipeline_mode<synchronous>, transform_indices = @transform_4, window_bounds = array<i64: 128, 32>}, {pipeline_mode = #tpu.pipeline_mode<synchronous>, transform_indices = @transform_5, window_bounds = array<i64: 8, 32>}, {transform_indices = @transform_6, window_bounds = array<i64: 16, 32>}]} {
    %c0 = arith.constant 0 : index
    %c0_0 = arith.constant 0 : index
    %0 = vector.load %arg1[%c0, %c0_0] : memref<16x32xf32, #tpu.memory_space<vmem>>, vector<16x32xf32>
    %c0_1 = arith.constant 0 : index
    %c0_2 = arith.constant 0 : index
    %1 = vector.load %arg6[%c0_1, %c0_2] : memref<8x32xf32, #tpu.memory_space<vmem>>, vector<8x32xf32>
    %2 = vector.extract_strided_slice %1 {offsets = [0, 0], sizes = [1, 32], strides = [1, 1]} : vector<8x32xf32> to vector<1x32xf32>
    %3 = vector.extract_strided_slice %1 {offsets = [1, 0], sizes = [1, 32], strides = [1, 1]} : vector<8x32xf32> to vector<1x32xf32>
    %4 = vector.extract_strided_slice %1 {offsets = [2, 0], sizes = [1, 32], strides = [1, 1]} : vector<8x32xf32> to vector<1x32xf32>
    %5 = vector.extract_strided_slice %1 {offsets = [3, 0], sizes = [1, 32], strides = [1, 1]} : vector<8x32xf32> to vector<1x32xf32>
    %6 = vector.extract_strided_slice %1 {offsets = [4, 0], sizes = [1, 32], strides = [1, 1]} : vector<8x32xf32> to vector<1x32xf32>
    %7 = vector.extract_strided_slice %1 {offsets = [5, 0], sizes = [1, 32], strides = [1, 1]} : vector<8x32xf32> to vector<1x32xf32>
    %c0_3 = arith.constant 0 : index
    %c0_4 = arith.constant 0 : index
    %8 = vector.load %arg2[%c0_3, %c0_4] : memref<32x32xf32, #tpu.memory_space<vmem>>, vector<32x32xf32>
    %cst = arith.constant dense<0.000000e+00> : vector<16x32xf32>
    %9 = tpu.matmul %0, %8, %cst {dimension_numbers = #tpu.dot_dimension_numbers<[1], [0], [0], [1], [0, 0, 1, 1], [], []>} : vector<16x32xf32>, vector<32x32xf32>, vector<16x32xf32> -> vector<16x32xf32>
    %10 = vector.broadcast %2 : vector<1x32xf32> to vector<16x32xf32>
    %11 = arith.addf %9, %10 : vector<16x32xf32>
    %12 = arith.addf %0, %11 : vector<16x32xf32>
    %cst_5 = arith.constant dense<0.000000e+00> : vector<16xf32>
    %13 = vector.multi_reduction <add>, %12, %cst_5 [1] : vector<16x32xf32> to vector<16xf32>
    %14 = vector.shape_cast %13 : vector<16xf32> to vector<16x1xf32>
    %cst_6 = arith.constant 3.200000e+01 : f32
    %15 = vector.broadcast %cst_6 : f32 to vector<16x1xf32>
    %16 = arith.divf %14, %15 : vector<16x1xf32>
    %17 = vector.broadcast %16 : vector<16x1xf32> to vector<16x32xf32>
    %18 = arith.subf %12, %17 : vector<16x32xf32>
    %19 = arith.mulf %18, %18 : vector<16x32xf32>
    %cst_7 = arith.constant dense<0.000000e+00> : vector<16xf32>
    %20 = vector.multi_reduction <add>, %19, %cst_7 [1] : vector<16x32xf32> to vector<16xf32>
    %21 = vector.shape_cast %20 : vector<16xf32> to vector<16x1xf32>
    %cst_8 = arith.constant 3.200000e+01 : f32
    %22 = vector.broadcast %cst_8 : f32 to vector<16x1xf32>
    %23 = arith.divf %21, %22 : vector<16x1xf32>
    %cst_9 = arith.constant 9.99999974E-6 : f32
    %24 = vector.broadcast %cst_9 : f32 to vector<16x1xf32>
    %25 = arith.addf %23, %24 : vector<16x1xf32>
    %26 = math.rsqrt %25 : vector<16x1xf32>
    %27 = vector.broadcast %16 : vector<16x1xf32> to vector<16x32xf32>
    %28 = arith.subf %12, %27 : vector<16x32xf32>
    %29 = vector.broadcast %26 : vector<16x1xf32> to vector<16x32xf32>
    %30 = arith.mulf %28, %29 : vector<16x32xf32>
    %31 = vector.broadcast %3 : vector<1x32xf32> to vector<16x32xf32>
    %32 = arith.mulf %30, %31 : vector<16x32xf32>
    %33 = vector.broadcast %4 : vector<1x32xf32> to vector<16x32xf32>
    %34 = arith.addf %32, %33 : vector<16x32xf32>
    %c0_10 = arith.constant 0 : index
    %c0_11 = arith.constant 0 : index
    %35 = vector.load %arg3[%c0_10, %c0_11] : memref<32x128xf32, #tpu.memory_space<vmem>>, vector<32x128xf32>
    %cst_12 = arith.constant dense<0.000000e+00> : vector<16x128xf32>
    %36 = tpu.matmul %34, %35, %cst_12 {dimension_numbers = #tpu.dot_dimension_numbers<[1], [0], [0], [1], [0, 0, 1, 1], [], []>} : vector<16x32xf32>, vector<32x128xf32>, vector<16x128xf32> -> vector<16x128xf32>
    %c0_13 = arith.constant 0 : index
    %c0_14 = arith.constant 0 : index
    %37 = vector.load %arg4[%c0_13, %c0_14] : memref<1x128xf32, #tpu.memory_space<vmem>>, vector<1x128xf32>
    %38 = vector.broadcast %37 : vector<1x128xf32> to vector<16x128xf32>
    %39 = arith.addf %36, %38 : vector<16x128xf32>
    %cst_15 = arith.constant 5.000000e-01 : f32
    %40 = vector.broadcast %cst_15 : f32 to vector<16x128xf32>
    %41 = arith.mulf %40, %39 : vector<16x128xf32>
    %cst_16 = arith.constant 2.000000e+00 : f32
    %42 = math.sqrt %cst_16 : f32
    %cst_17 = arith.constant 1.000000e+00 : f32
    %43 = arith.divf %cst_17, %42 : f32
    %44 = vector.broadcast %43 : f32 to vector<16x128xf32>
    %45 = arith.mulf %39, %44 : vector<16x128xf32>
    %46 = math.erf %45 : vector<16x128xf32>
    %cst_18 = arith.constant 1.000000e+00 : f32
    %47 = vector.broadcast %cst_18 : f32 to vector<16x128xf32>
    %48 = arith.addf %47, %46 : vector<16x128xf32>
    %49 = arith.mulf %41, %48 : vector<16x128xf32>
    %c0_19 = arith.constant 0 : index
    %c0_20 = arith.constant 0 : index
    %50 = vector.load %arg8[%c0_19, %c0_20] : memref<16x128xf32, #tpu.memory_space<vmem>>, vector<16x128xf32>
    tpu.vector_store %arg8[%c0_19, %c0_20], %49 {strides = array<i32>} : memref<16x128xf32, #tpu.memory_space<vmem>>, vector<16x128xf32>,
    %c0_21 = arith.constant 0 : index
    %c0_22 = arith.constant 0 : index
    %51 = vector.load %arg8[%c0_21, %c0_22] : memref<16x128xf32, #tpu.memory_space<vmem>>, vector<16x128xf32>
    %c0_23 = arith.constant 0 : index
    %c0_24 = arith.constant 0 : index
    %52 = vector.load %arg5[%c0_23, %c0_24] : memref<128x32xf32, #tpu.memory_space<vmem>>, vector<128x32xf32>
    %cst_25 = arith.constant dense<0.000000e+00> : vector<16x32xf32>
    %53 = tpu.matmul %51, %52, %cst_25 {dimension_numbers = #tpu.dot_dimension_numbers<[1], [0], [0], [1], [0, 0, 1, 1], [], []>} : vector<16x128xf32>, vector<128x32xf32>, vector<16x32xf32> -> vector<16x32xf32>
    %54 = vector.broadcast %5 : vector<1x32xf32> to vector<16x32xf32>
    %55 = arith.addf %53, %54 : vector<16x32xf32>
    %56 = arith.addf %34, %55 : vector<16x32xf32>
    %cst_26 = arith.constant dense<0.000000e+00> : vector<16xf32>
    %57 = vector.multi_reduction <add>, %56, %cst_26 [1] : vector<16x32xf32> to vector<16xf32>
    %58 = vector.shape_cast %57 : vector<16xf32> to vector<16x1xf32>
    %cst_27 = arith.constant 3.200000e+01 : f32
    %59 = vector.broadcast %cst_27 : f32 to vector<16x1xf32>
    %60 = arith.divf %58, %59 : vector<16x1xf32>
    %61 = vector.broadcast %60 : vector<16x1xf32> to vector<16x32xf32>
    %62 = arith.subf %56, %61 : vector<16x32xf32>
    %63 = arith.mulf %62, %62 : vector<16x32xf32>
    %cst_28 = arith.constant dense<0.000000e+00> : vector<16xf32>
    %64 = vector.multi_reduction <add>, %63, %cst_28 [1] : vector<16x32xf32> to vector<16xf32>
    %65 = vector.shape_cast %64 : vector<16xf32> to vector<16x1xf32>
    %cst_29 = arith.constant 3.200000e+01 : f32
    %66 = vector.broadcast %cst_29 : f32 to vector<16x1xf32>
    %67 = arith.divf %65, %66 : vector<16x1xf32>
    %cst_30 = arith.constant 9.99999974E-6 : f32
    %68 = vector.broadcast %cst_30 : f32 to vector<16x1xf32>
    %69 = arith.addf %67, %68 : vector<16x1xf32>
    %70 = math.rsqrt %69 : vector<16x1xf32>
    %71 = vector.broadcast %60 : vector<16x1xf32> to vector<16x32xf32>
    %72 = arith.subf %56, %71 : vector<16x32xf32>
    %73 = vector.broadcast %70 : vector<16x1xf32> to vector<16x32xf32>
    %74 = arith.mulf %72, %73 : vector<16x32xf32>
    %75 = vector.broadcast %6 : vector<1x32xf32> to vector<16x32xf32>
    %76 = arith.mulf %74, %75 : vector<16x32xf32>
    %77 = vector.broadcast %7 : vector<1x32xf32> to vector<16x32xf32>
    %78 = arith.addf %76, %77 : vector<16x32xf32>
    %c0_31 = arith.constant 0 : index
    %c0_32 = arith.constant 0 : index
    %79 = vector.load %arg7[%c0_31, %c0_32] : memref<16x32xf32, #tpu.memory_space<vmem>>, vector<16x32xf32>
    tpu.vector_store %arg7[%c0_31, %c0_32], %78 {strides = array<i32>} : memref<16x32xf32, #tpu.memory_space<vmem>>, vector<16x32xf32>,
    return
  }
  func.func @transform_0(%arg0: i32) -> (i32, i32) {
    %c0_i32 = arith.constant 0 : i32
    %c0_i32_0 = arith.constant 0 : i32
    return %arg0, %c0_i32 : i32, i32
  }
  func.func @transform_1(%arg0: i32) -> (i32, i32) {
    %c0_i32 = arith.constant 0 : i32
    %c0_i32_0 = arith.constant 0 : i32
    %c0_i32_1 = arith.constant 0 : i32
    return %c0_i32, %c0_i32_0 : i32, i32
  }
  func.func @transform_2(%arg0: i32) -> (i32, i32) {
    %c0_i32 = arith.constant 0 : i32
    %c0_i32_0 = arith.constant 0 : i32
    %c0_i32_1 = arith.constant 0 : i32
    return %c0_i32, %c0_i32_0 : i32, i32
  }
  func.func @transform_3(%arg0: i32) -> (i32, i32) {
    %c0_i32 = arith.constant 0 : i32
    %c0_i32_0 = arith.constant 0 : i32
    %c0_i32_1 = arith.constant 0 : i32
    return %c0_i32, %c0_i32_0 : i32, i32
  }
  func.func @transform_4(%arg0: i32) -> (i32, i32) {
    %c0_i32 = arith.constant 0 : i32
    %c0_i32_0 = arith.constant 0 : i32
    %c0_i32_1 = arith.constant 0 : i32
    return %c0_i32, %c0_i32_0 : i32, i32
  }
  func.func @transform_5(%arg0: i32) -> (i32, i32) {
    %c0_i32 = arith.constant 0 : i32
    %c0_i32_0 = arith.constant 0 : i32
    %c0_i32_1 = arith.constant 0 : i32
    return %c0_i32, %c0_i32_0 : i32, i32
  }
  func.func @transform_6(%arg0: i32) -> (i32, i32) {
    %c0_i32 = arith.constant 0 : i32
    %c0_i32_0 = arith.constant 0 : i32
    return %arg0, %c0_i32 : i32, i32
  }
}

</mosaic_0001>

<llo_original>
// kernel: multi_scale_graph_transformer_layer.1
$region0: #{multi_scale_graph_transformer_layer.1}
  #allocation0 [shape = 'u32[]', space=smem, size = 0x4, offset = 0x4, fixed_abs, tag = 'smem constant byte address 0x4 - core index']
  #allocation1 [shape = 'u32[144,128]{1,0:T(1,128)}', space=vmem, size = 0x12000, scoped, tag = 'internal scratch']
  #allocation2 [shape = 'f32[16,128]{1,0:T(8,128)}', space=vmem, size = 0x2000, scoped, tag = 'scratch operand']
  %s0 = inlined_call_operand.vmem [shape: f32[16,32], index: 0, kind: input, shape index: {}]
  %s1 = inlined_call_operand.vmem [shape: f32[32,32], index: 1, kind: input, shape index: {}]
  %s2 = inlined_call_operand.vmem [shape: f32[32,128], index: 2, kind: input, shape index: {}]
  %s3 = inlined_call_operand.vmem [shape: f32[1,128], index: 3, kind: input, shape index: {}]
  %s4 = inlined_call_operand.vmem [shape: f32[128,32], index: 4, kind: input, shape index: {}]
  %s5 = inlined_call_operand.vmem [shape: f32[8,32], index: 5, kind: input, shape index: {}]
  %s6 = inlined_call_operand.hbm [shape: f32[16,32], index: 6, kind: output, shape index: {}]
  %s7 = sld [smem:[#allocation0]]
  $region34: #{multi_scale_graph_transformer_layer.1} parent=0
    _
  %s9 = ssub.s32 1, %s7
  %s10 = scalar_select 0, %s9, %s7
  $region1: #{multi_scale_graph_transformer_layer.1} parent=0
    #allocation3 [shape = 'u8[8192]{0}', space=vmem, size = 0x2000, scoped, tag = 'output window, operand 0, single buffered']
    #allocation4 [shape = 's32[1]{0}', space=sflag, size = 0x4, scoped, tag = 'scoped memory for multi_scale_graph_transformer_layer.1']
    %11 = vsyncpa [#allocation4], 0
    // Predicated region
    $region2: #{multi_scale_graph_transformer_layer.1} parent=1 // pred_check
      _
    $region3: #{multi_scale_graph_transformer_layer.1} parent=1 // pred_check_branch
      %13 = sbr.rel (0) target = $region5
    $region4: #{multi_scale_graph_transformer_layer.1} parent=1 // pred_region
      _
    $region5: #{multi_scale_graph_transformer_layer.1} parent=1 // pred_fallthru
      _
    // Predicated region
    $region6: #{multi_scale_graph_transformer_layer.1} parent=1 // pred_check
      _
    $region7: #{multi_scale_graph_transformer_layer.1} parent=1 // pred_check_branch
      %15 = sbr.rel (0) target = $region9
    $region8: #{multi_scale_graph_transformer_layer.1} parent=1 // pred_region
      _
    $region9: #{multi_scale_graph_transformer_layer.1} parent=1 // pred_fallthru
      _
    // Predicated region
    $region10: #{multi_scale_graph_transformer_layer.1} parent=1 // pred_check
      _
    $region11: #{multi_scale_graph_transformer_layer.1} parent=1 // pred_check_branch
      %17 = sbr.rel (0) target = $region13
    $region12: #{multi_scale_graph_transformer_layer.1} parent=1 // pred_region
      _
    $region13: #{multi_scale_graph_transformer_layer.1} parent=1 // pred_fallthru
      _
    // Predicated region
    $region14: #{multi_scale_graph_transformer_layer.1} parent=1 // pred_check
      _
    $region15: #{multi_scale_graph_transformer_layer.1} parent=1 // pred_check_branch
      %19 = sbr.rel (0) target = $region17
    $region16: #{multi_scale_graph_transformer_layer.1} parent=1 // pred_region
      _
    $region17: #{multi_scale_graph_transformer_layer.1} parent=1 // pred_fallthru
      _
    // Predicated region
    $region18: #{multi_scale_graph_transformer_layer.1} parent=1 // pred_check
      _
    $region19: #{multi_scale_graph_transformer_layer.1} parent=1 // pred_check_branch
      %21 = sbr.rel (0) target = $region21
    $region20: #{multi_scale_graph_transformer_layer.1} parent=1 // pred_region
      _
    $region21: #{multi_scale_graph_transformer_layer.1} parent=1 // pred_fallthru
      _
    // Predicated region
    $region22: #{multi_scale_graph_transformer_layer.1} parent=1 // pred_check
      _
    $region23: #{multi_scale_graph_transformer_layer.1} parent=1 // pred_check_branch
      %23 = sbr.rel (0) target = $region25
    $region24: #{multi_scale_graph_transformer_layer.1} parent=1 // pred_region
      _
    $region25: #{multi_scale_graph_transformer_layer.1} parent=1 // pred_fallthru
      _
    %v24 = vld [vmem:[%s0] sm:$0xff]
    %v25 = vld [vmem:[%s0 + $0x8] sm:$0xff]
    %v26 = vld [vmem:[%s5] sm:$0xff]
    %v27 = vld [vmem:[%s1] sm:$0xff]
    %v28 = vld [vmem:[%s1 + $0x8] sm:$0xff]
    %v29 = vld [vmem:[%s1 + $0x10] sm:$0xff]
    %v30 = vld [vmem:[%s1 + $0x18] sm:$0xff]
    %v31 = vlaneseq
    %v32 = vshrl.u32 %v31, 7
    %v33 = vsub.s32 0, %v32
    %v34 = vrot.slane %v26, %v33
    %vm35 = vcmask 261120
    %v37 = vsel %vm35, %v24, 0
    %v40 = vsel %vm35, %v25, 0
    %42 = vmatprep.subr.mxu0 0.0
    %43 = vmatpush1.msra.mxu0 0.0
    %44 = vmatprep.subr.mxu0 0.0
    %45 = vmatpush1.msra.mxu0 0.0
    %46 = vmatprep.subr.mxu0 0.0
    %47 = vmatpush1.msra.mxu0 0.0
    %48 = vmatprep.subr.mxu0 0.0
    %49 = vmatpush1.msra.mxu0 0.0
    %50 = vmatprep.subr.mxu0 0.0
    %51 = vmatpush1.msra.mxu0 0.0
    %52 = vmatprep.subr.mxu0 0.0
    %53 = vmatpush1.msra.mxu0 0.0
    %54 = vmatprep.subr.mxu0 0.0
    %55 = vmatpush1.msra.mxu0 0.0
    %56 = vmatprep.subr.mxu0 0.0
    %57 = vmatpush1.msra.mxu0 0.0
    %58 = vmatprep.subr.mxu0 0.0
    %59 = vmatpush1.msra.mxu0 0.0
    %60 = vmatprep.subr.mxu0 0.0
    %61 = vmatpush1.msra.mxu0 0.0
    %62 = vmatprep.subr.mxu0 0.0
    %63 = vmatpush1.msra.mxu0 0.0
    %64 = vmatprep.subr.mxu0 0.0
    %65 = vmatpush1.msra.mxu0 0.0
    %66 = vmatprep.subr.mxu0 0.0
    %67 = vmatpush1.msra.mxu0 %v30
    %68 = vmatprep.subr.mxu0 0.0
    %69 = vmatpush1.msra.mxu0 %v29
    %70 = vmatprep.subr.mxu0 0.0
    %71 = vmatpush1.msra.mxu0 %v28
    %72 = vmatprep.subr.mxu0 0.0
    %73 = vmatpush1.msra.mxu0 %v27
    %74 = vmatprep.subr.mxu0 0.0
    %75 = vmatpush2.msra.mxu0 0.0
    %76 = vmatprep.subr.mxu0 0.0
    %77 = vmatpush2.msra.mxu0 0.0
    %78 = vmatprep.subr.mxu0 0.0
    %79 = vmatpush2.msra.mxu0 0.0
    %80 = vmatprep.subr.mxu0 0.0
    %81 = vmatpush2.msra.mxu0 0.0
    %82 = vmatprep.subr.mxu0 0.0
    %83 = vmatpush2.msra.mxu0 0.0
    %84 = vmatprep.subr.mxu0 0.0
    %85 = vmatpush2.msra.mxu0 0.0
    %86 = vmatprep.subr.mxu0 0.0
    %87 = vmatpush2.msra.mxu0 0.0
    %88 = vmatprep.subr.mxu0 0.0
    %89 = vmatpush2.msra.mxu0 0.0
    %90 = vmatprep.subr.mxu0 0.0
    %91 = vmatpush2.msra.mxu0 0.0
    %92 = vmatprep.subr.mxu0 0.0
    %93 = vmatpush2.msra.mxu0 0.0
    %94 = vmatprep.subr.mxu0 0.0
    %95 = vmatpush2.msra.mxu0 0.0
    %96 = vmatprep.subr.mxu0 0.0
    %97 = vmatpush2.msra.mxu0 0.0
    %98 = vmatprep.subr.mxu0 0.0
    %99 = vmatpush2.msra.mxu0 0.0
    %100 = vmatprep.subr.mxu0 0.0
    %101 = vmatpush2.msra.mxu0 0.0
    %102 = vmatprep.subr.mxu0 0.0
    %103 = vmatpush2.msra.mxu0 0.0
    %104 = vmatprep.subr.mxu0 0.0
    %105 = vmatpush2.msra.mxu0 0.0
    %106 = vmatprep.mubr.f32.mxu0 0.0
    %107 = vmatmul.mubr.f32.gmra.mxu0 %v37
    %v108 = vpop.f32.mrf.mxu0
    %v109 = vadd.f32 %v34, %v108
    %v110 = vpop.f32.mrf.mxu0
    %111 = vmatprep.mubr.f32.mxu0 0.0
    %112 = vmatmul.mubr.f32.gmra.mxu0 %v40
    %v113 = vpop.f32.mrf.mxu0
    %v114 = vadd.f32 %v34, %v113
    %v115 = vpop.f32.mrf.mxu0
    %116 = vdwg.mxu0
    %v117 = vadd.f32 %v24, %v109
    %v118 = vadd.f32 %v25, %v114
    %v119 = vsel %vm35, %v117, 0.0
    %120 = vadd.xlane.f32.xlu0 %v119
    %v121 = vpop.xlane.xlu0 %120
    %v122 = vsel %vm35, %v118, 0.0
    %123 = vadd.xlane.f32.xlu0 %v122
    %v124 = vpop.xlane.xlu0 %123
    %v125 = vrcp.pop 32.0
    %v126 = vmul.f32 %v121, %v125
    %v127 = vmul.f32 %v124, %v125
    %v128 = vsub.f32 %v117, %v126
    %v129 = vsub.f32 %v118, %v127
    %v130 = vmul.f32 %v128, %v128
    %v131 = vmul.f32 %v129, %v129
    %v132 = vsel %vm35, %v130, 0.0
    %133 = vadd.xlane.f32.xlu0 %v132
    %v134 = vpop.xlane.xlu0 %133
    %v135 = vsel %vm35, %v131, 0.0
    %136 = vadd.xlane.f32.xlu0 %v135
    %v137 = vpop.xlane.xlu0 %136
    %v138 = vmul.f32 %v134, %v125
    %v139 = vmul.f32 %v137, %v125
    %v140 = vadd.f32 %v138, 1e-05
    %v141 = vadd.f32 %v139, 1e-05
    %v142 = vrsqrt.pop %v140
    %v143 = vrsqrt.pop %v141
    %v144 = vmul.f32 %v128, %v142
    %v145 = vmul.f32 %v129, %v143
    %v146 = vlaneseq
    %v147 = vshrl.u32 %v146, 7
    %v148 = vsub.s32 1, %v147
    %v149 = vrot.slane %v26, %v148
    %v150 = vmul.f32 %v144, %v149
    %v151 = vmul.f32 %v145, %v149
    %v152 = vlaneseq
    %v153 = vshrl.u32 %v152, 7
    %v154 = vsub.s32 2, %v153
    %v155 = vrot.slane %v26, %v154
    %v156 = vadd.f32 %v150, %v155
    %v157 = vadd.f32 %v151, %v155
    %v158 = vld [vmem:[%s2] sm:$0xff]
    %v159 = vld [vmem:[%s2 + $0x8] sm:$0xff]
    %v160 = vld [vmem:[%s2 + $0x10] sm:$0xff]
    %v161 = vld [vmem:[%s2 + $0x18] sm:$0xff]
    %v162 = vld [vmem:[%s3] sm:$0x1]
    %v164 = vlaneseq
    %v165 = vshrl.u32 %v164, 7
    %v166 = vsub.s32 0, %v165
    %v167 = vrot.slane %v162, %v166
    %v170 = vsel %vm35, %v156, 0
    %v173 = vsel %vm35, %v157, 0
    %175 = vmatprep.subr.mxu0 0.0
    %176 = vmatpush1.msra.mxu0 0.0
    %177 = vmatprep.subr.mxu0 0.0
    %178 = vmatpush1.msra.mxu0 0.0
    %179 = vmatprep.subr.mxu0 0.0
    %180 = vmatpush1.msra.mxu0 0.0
    %181 = vmatprep.subr.mxu0 0.0
    %182 = vmatpush1.msra.mxu0 0.0
    %183 = vmatprep.subr.mxu0 0.0
    %184 = vmatpush1.msra.mxu0 0.0
    %185 = vmatprep.subr.mxu0 0.0
    %186 = vmatpush1.msra.mxu0 0.0
    %187 = vmatprep.subr.mxu0 0.0
    %188 = vmatpush1.msra.mxu0 0.0
    %189 = vmatprep.subr.mxu0 0.0
    %190 = vmatpush1.msra.mxu0 0.0
    %191 = vmatprep.subr.mxu0 0.0
    %192 = vmatpush1.msra.mxu0 0.0
    %193 = vmatprep.subr.mxu0 0.0
    %194 = vmatpush1.msra.mxu0 0.0
    %195 = vmatprep.subr.mxu0 0.0
    %196 = vmatpush1.msra.mxu0 0.0
    %197 = vmatprep.subr.mxu0 0.0
    %198 = vmatpush1.msra.mxu0 0.0
    %199 = vmatprep.subr.mxu0 0.0
    %200 = vmatpush1.msra.mxu0 %v161
    %201 = vmatprep.subr.mxu0 0.0
    %202 = vmatpush1.msra.mxu0 %v160
    %203 = vmatprep.subr.mxu0 0.0
    %204 = vmatpush1.msra.mxu0 %v159
    %205 = vmatprep.subr.mxu0 0.0
    %206 = vmatpush1.msra.mxu0 %v158
    %207 = vmatprep.subr.mxu0 0.0
    %208 = vmatpush2.msra.mxu0 0.0
    %209 = vmatprep.subr.mxu0 0.0
    %210 = vmatpush2.msra.mxu0 0.0
    %211 = vmatprep.subr.mxu0 0.0
    %212 = vmatpush2.msra.mxu0 0.0
    %213 = vmatprep.subr.mxu0 0.0
    %214 = vmatpush2.msra.mxu0 0.0
    %215 = vmatprep.subr.mxu0 0.0
    %216 = vmatpush2.msra.mxu0 0.0
    %217 = vmatprep.subr.mxu0 0.0
    %218 = vmatpush2.msra.mxu0 0.0
    %219 = vmatprep.subr.mxu0 0.0
    %220 = vmatpush2.msra.mxu0 0.0
    %221 = vmatprep.subr.mxu0 0.0
    %222 = vmatpush2.msra.mxu0 0.0
    %223 = vmatprep.subr.mxu0 0.0
    %224 = vmatpush2.msra.mxu0 0.0
    %225 = vmatprep.subr.mxu0 0.0
    %226 = vmatpush2.msra.mxu0 0.0
    %227 = vmatprep.subr.mxu0 0.0
    %228 = vmatpush2.msra.mxu0 0.0
    %229 = vmatprep.subr.mxu0 0.0
    %230 = vmatpush2.msra.mxu0 0.0
    %231 = vmatprep.subr.mxu0 0.0
    %232 = vmatpush2.msra.mxu0 0.0
    %233 = vmatprep.subr.mxu0 0.0
    %234 = vmatpush2.msra.mxu0 0.0
    %235 = vmatprep.subr.mxu0 0.0
    %236 = vmatpush2.msra.mxu0 0.0
    %237 = vmatprep.subr.mxu0 0.0
    %238 = vmatpush2.msra.mxu0 0.0
    %239 = vmatprep.mubr.f32.mxu0 0.0
    %240 = vmatmul.mubr.f32.gmra.mxu0 %v170
    %v241 = vpop.f32.mrf.mxu0
    %v242 = vadd.f32 %v167, %v241
    %v243 = vpop.f32.mrf.mxu0
    %244 = vmatprep.mubr.f32.mxu0 0.0
    %245 = vmatmul.mubr.f32.gmra.mxu0 %v173
    %v246 = vpop.f32.mrf.mxu0
    %v247 = vadd.f32 %v167, %v246
    %v248 = vpop.f32.mrf.mxu0
    %249 = vdwg.mxu0
    %v250 = vmul.f32 %v242, 0.5
    %v251 = vmul.f32 %v247, 0.5
    %v252 = vmul.f32 %v242, 0.70710677
    %v253 = vmul.f32 %v247, 0.70710677
    %v254 = verf.f32.pop %v252
    %v255 = verf.f32.pop %v253
    %v256 = vadd.f32 %v254, 1.0
    %v257 = vadd.f32 %v255, 1.0
    %v258 = vmul.f32 %v250, %v256
    %v259 = vmul.f32 %v251, %v257
    %260 = vst [vmem:[#allocation2] sm:$0xff] %v258
    %261 = vst [vmem:[#allocation2 + $0x8] sm:$0xff] %v259
    %v262 = vld [vmem:[#allocation2] sm:$0xff]
    %v263 = vld [vmem:[#allocation2 + $0x8] sm:$0xff]
    %v264 = vld [vmem:[%s4] sm:$0xff]
    %v265 = vld [vmem:[%s4 + $0x8] sm:$0xff]
    %v266 = vld [vmem:[%s4 + $0x10] sm:$0xff]
    %v267 = vld [vmem:[%s4 + $0x18] sm:$0xff]
    %v268 = vld [vmem:[%s4 + $0x20] sm:$0xff]
    %v269 = vld [vmem:[%s4 + $0x28] sm:$0xff]
    %v270 = vld [vmem:[%s4 + $0x30] sm:$0xff]
    %v271 = vld [vmem:[%s4 + $0x38] sm:$0xff]
    %v272 = vld [vmem:[%s4 + $0x40] sm:$0xff]
    %v273 = vld [vmem:[%s4 + $0x48] sm:$0xff]
    %v274 = vld [vmem:[%s4 + $0x50] sm:$0xff]
    %v275 = vld [vmem:[%s4 + $0x58] sm:$0xff]
    %v276 = vld [vmem:[%s4 + $0x60] sm:$0xff]
    %v277 = vld [vmem:[%s4 + $0x68] sm:$0xff]
    %v278 = vld [vmem:[%s4 + $0x70] sm:$0xff]
    %v279 = vld [vmem:[%s4 + $0x78] sm:$0xff]
    %v280 = vlaneseq
    %v281 = vshrl.u32 %v280, 7
    %v282 = vsub.s32 3, %v281
    %v283 = vrot.slane %v26, %v282
    %284 = vmatprep.subr.mxu0 0.0
    %285 = vmatpush1.msra.mxu0 %v279
    %286 = vmatprep.subr.mxu0 0.0
    %287 = vmatpush1.msra.mxu0 %v278
    %288 = vmatprep.subr.mxu0 0.0
    %289 = vmatpush1.msra.mxu0 %v277
    %290 = vmatprep.subr.mxu0 0.0
    %291 = vmatpush1.msra.mxu0 %v276
    %292 = vmatprep.subr.mxu0 0.0
    %293 = vmatpush1.msra.mxu0 %v275
    %294 = vmatprep.subr.mxu0 0.0
    %295 = vmatpush1.msra.mxu0 %v274
    %296 = vmatprep.subr.mxu0 0.0
    %297 = vmatpush1.msra.mxu0 %v273
    %298 = vmatprep.subr.mxu0 0.0
    %299 = vmatpush1.msra.mxu0 %v272
    %300 = vmatprep.subr.mxu0 0.0
    %301 = vmatpush1.msra.mxu0 %v271
    %302 = vmatprep.subr.mxu0 0.0
    %303 = vmatpush1.msra.mxu0 %v270
    %304 = vmatprep.subr.mxu0 0.0
    %305 = vmatpush1.msra.mxu0 %v269
    %306 = vmatprep.subr.mxu0 0.0
    %307 = vmatpush1.msra.mxu0 %v268
    %308 = vmatprep.subr.mxu0 0.0
    %309 = vmatpush1.msra.mxu0 %v267
    %310 = vmatprep.subr.mxu0 0.0
    %311 = vmatpush1.msra.mxu0 %v266
    %312 = vmatprep.subr.mxu0 0.0
    %313 = vmatpush1.msra.mxu0 %v265
    %314 = vmatprep.subr.mxu0 0.0
    %315 = vmatpush1.msra.mxu0 %v264
    %316 = vmatprep.subr.mxu0 0.0
    %317 = vmatpush2.msra.mxu0 0.0
    %318 = vmatprep.subr.mxu0 0.0
    %319 = vmatpush2.msra.mxu0 0.0
    %320 = vmatprep.subr.mxu0 0.0
    %321 = vmatpush2.msra.mxu0 0.0
    %322 = vmatprep.subr.mxu0 0.0
    %323 = vmatpush2.msra.mxu0 0.0
    %324 = vmatprep.subr.mxu0 0.0
    %325 = vmatpush2.msra.mxu0 0.0
    %326 = vmatprep.subr.mxu0 0.0
    %327 = vmatpush2.msra.mxu0 0.0
    %328 = vmatprep.subr.mxu0 0.0
    %329 = vmatpush2.msra.mxu0 0.0
    %330 = vmatprep.subr.mxu0 0.0
    %331 = vmatpush2.msra.mxu0 0.0
    %332 = vmatprep.subr.mxu0 0.0
    %333 = vmatpush2.msra.mxu0 0.0
    %334 = vmatprep.subr.mxu0 0.0
    %335 = vmatpush2.msra.mxu0 0.0
    %336 = vmatprep.subr.mxu0 0.0
    %337 = vmatpush2.msra.mxu0 0.0
    %338 = vmatprep.subr.mxu0 0.0
    %339 = vmatpush2.msra.mxu0 0.0
    %340 = vmatprep.subr.mxu0 0.0
    %341 = vmatpush2.msra.mxu0 0.0
    %342 = vmatprep.subr.mxu0 0.0
    %343 = vmatpush2.msra.mxu0 0.0
    %344 = vmatprep.subr.mxu0 0.0
    %345 = vmatpush2.msra.mxu0 0.0
    %346 = vmatprep.subr.mxu0 0.0
    %347 = vmatpush2.msra.mxu0 0.0
    %348 = vmatprep.mubr.f32.mxu0 0.0
    %349 = vmatmul.mubr.f32.gmra.mxu0 %v262
    %v350 = vpop.f32.mrf.mxu0
    %v351 = vadd.f32 %v283, %v350
    %v352 = vpop.f32.mrf.mxu0
    %353 = vmatprep.mubr.f32.mxu0 0.0
    %354 = vmatmul.mubr.f32.gmra.mxu0 %v263
    %v355 = vpop.f32.mrf.mxu0
    %v356 = vadd.f32 %v283, %v355
    %v357 = vpop.f32.mrf.mxu0
    %358 = vdwg.mxu0
    %v359 = vadd.f32 %v156, %v351
    %v360 = vadd.f32 %v157, %v356
    %v361 = vsel %vm35, %v359, 0.0
    %362 = vadd.xlane.f32.xlu0 %v361
    %v363 = vpop.xlane.xlu0 %362
    %v364 = vsel %vm35, %v360, 0.0
    %365 = vadd.xlane.f32.xlu0 %v364
    %v366 = vpop.xlane.xlu0 %365
    %v367 = vmul.f32 %v363, %v125
    %v368 = vmul.f32 %v366, %v125
    %v369 = vsub.f32 %v359, %v367
    %v370 = vsub.f32 %v360, %v368
    %v371 = vmul.f32 %v369, %v369
    %v372 = vmul.f32 %v370, %v370
    %v373 = vsel %vm35, %v371, 0.0
    %374 = vadd.xlane.f32.xlu0 %v373
    %v375 = vpop.xlane.xlu0 %374
    %v376 = vsel %vm35, %v372, 0.0
    %377 = vadd.xlane.f32.xlu0 %v376
    %v378 = vpop.xlane.xlu0 %377
    %v379 = vmul.f32 %v375, %v125
    %v380 = vmul.f32 %v378, %v125
    %v381 = vadd.f32 %v379, 1e-05
    %v382 = vadd.f32 %v380, 1e-05
    %v383 = vrsqrt.pop %v381
    %v384 = vrsqrt.pop %v382
    %v385 = vmul.f32 %v369, %v383
    %v386 = vmul.f32 %v370, %v384
    %v387 = vlaneseq
    %v388 = vshrl.u32 %v387, 7
    %v389 = vsub.s32 4, %v388
    %v390 = vrot.slane %v26, %v389
    %v391 = vmul.f32 %v385, %v390
    %v392 = vmul.f32 %v386, %v390
    %v393 = vlaneseq
    %v394 = vshrl.u32 %v393, 7
    %v395 = vsub.s32 5, %v394
    %v396 = vrot.slane %v26, %v395
    %v397 = vadd.f32 %v391, %v396
    %v398 = vadd.f32 %v392, %v396
    %399 = vst.msk [vmem:[#allocation3] sm:$0xff] %vm35, %v397
    %400 = vst.msk [vmem:[#allocation3 + $0x8] sm:$0xff] %vm35, %v398
    // Predicated region
    $region26: #{multi_scale_graph_transformer_layer.1} parent=1 // pred_check
      _
    $region27: #{multi_scale_graph_transformer_layer.1} parent=1 // pred_check_branch
      %402 = sbr.rel (0) target = $region29
    $region28: #{multi_scale_graph_transformer_layer.1} parent=1 // pred_region
      %s404 = ssub.s32 256, 256
      %405 = vsyncadd [#allocation4], %s404
      %s406 = sshll.u32 [#allocation3], 4
      %s407 = int_to_ptr.vmem [resolvable:$true] %s406
      %412 = dma.vmem_to_hbm [thread:$0]  %s407, 256, %s6, [#allocation4], 128, 128, 8
    $region29: #{multi_scale_graph_transformer_layer.1} parent=1 // pred_fallthru
      _
    // Predicated region
    $region30: #{multi_scale_graph_transformer_layer.1} parent=1 // pred_check
      _
    $region31: #{multi_scale_graph_transformer_layer.1} parent=1 // pred_check_branch
      %414 = sbr.rel (0) target = $region33
    $region32: #{multi_scale_graph_transformer_layer.1} parent=1 // pred_region
      %415 = dma.done [#allocation4], 256
    $region33: #{multi_scale_graph_transformer_layer.1} parent=1 // pred_fallthru
      _
    %416 = vsyncpa [#allocation4], 1

</llo_original>
